<compile_context>
chip_gen: v7x
topology: tpu7x:2x2x1
jax: 0.10.0
libtpu: 0.0.40
codegen_flags: <defaults>
</compile_context>

<pallas_src>
import functools
import math

import jax
import jax.numpy as jnp
from jax.experimental import pallas as pl
from jax.experimental.pallas import tpu as pltpu
import numpy as np


# ------------------------------- Pallas kernel -------------------------------

def _vfs_down_block_kernel(xs_ref, w_ref, b_ref, o_ref, *, th, wo):
    """One (image, row-tile) step.

    xs_ref: (1, hs, 4*Cin, wo+2)  bf16  space-to-depth'd, reflect-padded input
                                        (resident for all row tiles of image n)
    w_ref : (Cout, 36*Cin)        bf16  BN-scale-folded, phase-split weight
    b_ref : (Cout, 1)             f32   BN shift (bias)
    o_ref : (1, Cout, th*wo)      f32   lane-dense output tile
    """
    w = w_ref[...]                       # (Cout, K2), resident
    bias = b_ref[...]                    # (Cout, 1)
    r0 = pl.program_id(1) * th           # first output row of this tile

    row_outs = []
    for i in range(th):                  # static unroll
        # Build the (K2, wo) patch column block for output row r0+i from
        # 3x3 shifted, statically-sliced views of the slab (stride-1 conv on
        # the phase-split input == original stride-2 5x5 conv).
        pieces = []
        for a in range(3):
            row = xs_ref[0, r0 + i + a]          # (4*Cin, wo+2)
            for b in range(3):
                pieces.append(row[:, b:b + wo])  # (4*Cin, wo)
        pcol = jnp.concatenate(pieces, axis=0)   # (36*Cin, wo) bf16
        acc = jnp.dot(w, pcol, preferred_element_type=jnp.float32)  # (Cout, wo)
        row_outs.append(jnp.maximum(acc + bias, 0.0))
    # Single dense (Cout, th*wo) store: Cout sublanes x th*wo lanes.
    o_ref[0] = jnp.concatenate(row_outs, axis=1)


# --------------------------------- glue (JAX) --------------------------------

def variable_filter_size_down_block(x_nchw, params, eps=1e-5):
    """Forward pass matching the PyTorch module (inference-mode BatchNorm)."""
    w3, w5 = params["w3"], params["w5"]
    gamma, beta = params["gamma"], params["beta"]
    run_mean, run_var = params["running_mean"], params["running_var"]

    n, cin, h, w = x_nchw.shape
    ch = w3.shape[0]                     # out_channels_per_conv
    cout = 2 * ch
    ho = (h - 1) // 2 + 1                # == (h + 2*pad - k)//2 + 1 for both convs
    wo = (w - 1) // 2 + 1

    # ---- row tiling: whole image for small inputs, ~2048 output lanes else ---
    max_unroll = 32
    if ho <= max_unroll:
        th, n_rt = ho, 1                 # single tile -> block = full dim
    else:
        unit = 128 // math.gcd(wo, 128)  # smallest th with th*wo % 128 == 0
        th = unit * max(1, min(2048 // max(wo, 1), max_unroll) // unit)
        th = max(th, unit)
        n_rt = -(-ho // th)
    ho_pad = th * n_rt
    hs = ho_pad + 2                      # slab rows (stride-1 3x3 needs +2 halo)
    ws = wo + 2

    # ---- weights: embed 3x3 in centre of 5x5, fold BN scale, phase split -----
    w3f = w3.astype(jnp.float32)
    w5f = w5.astype(jnp.float32)
    w3_emb = jnp.zeros((ch, cin, 5, 5), jnp.float32).at[:, :, 1:4, 1:4].set(w3f)
    wc = jnp.concatenate([w3_emb, w5f], axis=0)          # [Cout, Cin, 5, 5]
    scale = (gamma / jnp.sqrt(run_var + eps)).astype(jnp.float32)
    shift = (beta - run_mean * scale).astype(jnp.float32)
    wf = wc * scale[:, None, None, None]                 # BN scale folded
    wf = jnp.pad(wf, ((0, 0), (0, 0), (0, 1), (0, 1)))   # [Cout, Cin, 6, 6]
    wr = wf.reshape(cout, cin, 3, 2, 3, 2)               # [o, c, a, ph, b, pw]
    wr = jnp.transpose(wr, (0, 2, 4, 3, 5, 1))           # [o, a, b, ph, pw, c]
    k2 = 36 * cin                                        # multiple of 16
    w_mat = wr.reshape(cout, k2).astype(jnp.bfloat16)
    bias = shift.reshape(cout, 1)                        # f32

    # ---- input: reflect pad=2 (bf16) + zero pad + space-to-depth(stride 2) ---
    xp = jnp.pad(x_nchw.astype(jnp.bfloat16),
                 ((0, 0), (0, 0), (2, 2), (2, 2)), mode="reflect")
    # Zero-extend so the phase split is rectangular; padded entries are only
    # ever multiplied by zero weight taps or belong to discarded padded rows.
    xp = jnp.pad(xp, ((0, 0), (0, 0),
                      (0, 2 * hs - (h + 4)), (0, 2 * ws - (w + 4))))
    xs = xp.reshape(n, cin, hs, 2, ws, 2)
    xs = jnp.transpose(xs, (0, 2, 3, 5, 1, 4))           # [n, r, ph, pw, c, s]
    xs = xs.reshape(n, hs, 4 * cin, ws)                  # bf16, ~1x input bytes

    kernel = functools.partial(_vfs_down_block_kernel, th=th, wo=wo)

    # ---- VMEM budget (double-buffer slab & output; weight/bias resident) -----
    def rup(v, m):
        return -(-v // m) * m
    xs_blk = hs * rup(4 * cin, 16) * rup(ws, 128) * 2
    out_blk = rup(cout, 8) * rup(th * wo, 128) * 4
    w_blk = rup(cout, 16) * rup(k2, 128) * 2
    b_blk = rup(cout, 8) * 128 * 4
    vmem_need = 2 * xs_blk + 2 * out_blk + w_blk + b_blk + (2 << 20)
    vmem_limit = int(min(max(vmem_need, 16 << 20), 48 << 20))

    out_flat = pl.pallas_call(
        kernel,
        out_shape=jax.ShapeDtypeStruct((n, cout, ho_pad * wo), jnp.float32),
        grid_spec=pltpu.PrefetchScalarGridSpec(
            num_scalar_prefetch=0,
            grid=(n, n_rt),
            in_specs=[
                # Full padded image per batch element; index constant over the
                # inner row axis -> fetched once per image.
                pl.BlockSpec((1, hs, 4 * cin, ws), lambda b, r: (b, 0, 0, 0)),
                pl.BlockSpec((cout, k2), lambda b, r: (0, 0)),   # folded weight
                pl.BlockSpec((cout, 1), lambda b, r: (0, 0)),    # BN shift
            ],
            out_specs=pl.BlockSpec((1, cout, th * wo), lambda b, r: (b, 0, r)),
        ),
        compiler_params=pltpu.CompilerParams(
            dimension_semantics=("parallel", "arbitrary"),
            vmem_limit_bytes=vmem_limit),
    )(xs, w_mat, bias)

    # [N, Cout, ho_pad*wo] -> NCHW (drop padded rows if any).
    out = out_flat.reshape(n, cout, ho_pad, wo)[:, :, :ho, :]
    return out


# ------------------------------- pure-JAX reference ---------------------------

def _reference_forward(x_nchw, params, eps=1e-5):
    w3, w5, gamma, beta, run_mean, run_var = (
        params["w3"], params["w5"], params["gamma"], params["beta"],
        params["running_mean"], params["running_var"])

    def conv(x, wgt, pad):
        xp = jnp.pad(x, ((0, 0), (0, 0), (pad, pad), (pad, pad)), mode="reflect")
        return jax.lax.conv_general_dilated(
            xp, wgt, window_strides=(2, 2), padding="VALID",
            dimension_numbers=("NCHW", "OIHW", "NCHW"))

    y = jnp.concatenate([conv(x_nchw, w3, 1), conv(x_nchw, w5, 2)], axis=1)
    scale = gamma / jnp.sqrt(run_var + eps)
    shift = beta - run_mean * scale
    y = y * scale[None, :, None, None] + shift[None, :, None, None]
    return jnp.maximum(y, 0.0)


# ------------------------------------ main ------------------------------------

if __name__ == "__main__":
    # N=2, in_channels=4, H=W=16, out_channels=8 (4 per branch), stride-2 -> 8x8.
    key = jax.random.PRNGKey(0)
    k_x, k_w3, k_w5, k_g, k_b, k_m, k_v = jax.random.split(key, 7)

    N, Cin, H, W = 2, 4, 16, 16
    Cout = 8
    Ch = Cout // 2

    x = jax.random.normal(k_x, (N, Cin, H, W), dtype=jnp.float32)

    params = {
        "w3": 0.1 * jax.random.normal(k_w3, (Ch, Cin, 3, 3), dtype=jnp.float32),
        "w5": 0.1 * jax.random.normal(k_w5, (Ch, Cin, 5, 5), dtype=jnp.float32),
        "gamma": jax.random.uniform(k_g, (Cout,), minval=0.5, maxval=1.5,
                                    dtype=jnp.float32),
        "beta": 0.1 * jax.random.normal(k_b, (Cout,), dtype=jnp.float32),
        "running_mean": 0.1 * jax.random.normal(k_m, (Cout,), dtype=jnp.float32),
        "running_var": jax.random.uniform(k_v, (Cout,), minval=0.5, maxval=1.5,
                                          dtype=jnp.float32),
    }

    out = variable_filter_size_down_block(x, params)
    out = jax.block_until_ready(out)

    ref = jax.block_until_ready(_reference_forward(x, params))
    # bf16 input/weight streams (f32 accumulation) -> moderate tolerance.
    np.testing.assert_allclose(np.asarray(out), np.asarray(ref),
                               rtol=2e-2, atol=2e-2)

    assert out.shape == (N, Cout, H // 2, W // 2)
    print("KERNEL_OK")
</pallas_src>

<mosaic_0001>
module attributes {stable_mosaic.version = 11 : i64} {
  func.func @_vfs_down_block_kernel(%arg0: i32, %arg1: i32, %arg2: memref<1x10x16x10xbf16, #tpu.memory_space<vmem>>, %arg3: memref<8x144xbf16, #tpu.memory_space<vmem>>, %arg4: memref<8x1xf32, #tpu.memory_space<vmem>>, %arg5: memref<1x8x64xf32, #tpu.memory_space<vmem>>) attributes {dimension_semantics = [#tpu.dimension_semantics<parallel>, #tpu.dimension_semantics<arbitrary>], iteration_bounds = array<i64: 2, 1>, scalar_prefetch = 0 : i64, scratch_operands = 0 : i64, tpu.core_type = #tpu.core_type<tc>, window_params = [{transform_indices = @transform_0, window_bounds = array<i64: 1, 10, 16, 10>}, {pipeline_mode = #tpu.pipeline_mode<synchronous>, transform_indices = @transform_1, window_bounds = array<i64: 8, 144>}, {pipeline_mode = #tpu.pipeline_mode<synchronous>, transform_indices = @transform_2, window_bounds = array<i64: 8, 1>}, {transform_indices = @transform_3, window_bounds = array<i64: 1, 8, 64>}]} {
    %c0 = arith.constant 0 : index
    %c0_0 = arith.constant 0 : index
    %0 = vector.load %arg3[%c0, %c0_0] : memref<8x144xbf16, #tpu.memory_space<vmem>>, vector<8x144xbf16>
    %c0_1 = arith.constant 0 : index
    %c0_2 = arith.constant 0 : index
    %1 = vector.load %arg4[%c0_1, %c0_2] : memref<8x1xf32, #tpu.memory_space<vmem>>, vector<8x1xf32>
    %c8_i32 = arith.constant 8 : i32
    %2 = arith.muli %arg1, %c8_i32 : i32
    %c0_i32 = arith.constant 0 : i32
    %3 = arith.addi %2, %c0_i32 : i32
    %c0_i32_3 = arith.constant 0 : i32
    %4 = arith.addi %3, %c0_i32_3 : i32
    %c0_4 = arith.constant 0 : index
    %5 = arith.index_cast %4 : i32 to index
    %c0_5 = arith.constant 0 : index
    %c0_6 = arith.constant 0 : index
    %6 = vector.load %arg2[%c0_4, %5, %c0_5, %c0_6] : memref<1x10x16x10xbf16, #tpu.memory_space<vmem>>, vector<1x1x16x10xbf16>
    %7 = vector.shape_cast %6 : vector<1x1x16x10xbf16> to vector<16x10xbf16>
    %8 = vector.extract_strided_slice %7 {offsets = [0, 0], sizes = [16, 8], strides = [1, 1]} : vector<16x10xbf16> to vector<16x8xbf16>
    %9 = vector.extract_strided_slice %7 {offsets = [0, 1], sizes = [16, 8], strides = [1, 1]} : vector<16x10xbf16> to vector<16x8xbf16>
    %10 = vector.extract_strided_slice %7 {offsets = [0, 2], sizes = [16, 8], strides = [1, 1]} : vector<16x10xbf16> to vector<16x8xbf16>
    %c0_i32_7 = arith.constant 0 : i32
    %11 = arith.addi %2, %c0_i32_7 : i32
    %c1_i32 = arith.constant 1 : i32
    %12 = arith.addi %11, %c1_i32 : i32
    %c0_8 = arith.constant 0 : index
    %13 = arith.index_cast %12 : i32 to index
    %c0_9 = arith.constant 0 : index
    %c0_10 = arith.constant 0 : index
    %14 = vector.load %arg2[%c0_8, %13, %c0_9, %c0_10] : memref<1x10x16x10xbf16, #tpu.memory_space<vmem>>, vector<1x1x16x10xbf16>
    %15 = vector.shape_cast %14 : vector<1x1x16x10xbf16> to vector<16x10xbf16>
    %16 = vector.extract_strided_slice %15 {offsets = [0, 0], sizes = [16, 8], strides = [1, 1]} : vector<16x10xbf16> to vector<16x8xbf16>
    %17 = vector.extract_strided_slice %15 {offsets = [0, 1], sizes = [16, 8], strides = [1, 1]} : vector<16x10xbf16> to vector<16x8xbf16>
    %18 = vector.extract_strided_slice %15 {offsets = [0, 2], sizes = [16, 8], strides = [1, 1]} : vector<16x10xbf16> to vector<16x8xbf16>
    %c0_i32_11 = arith.constant 0 : i32
    %19 = arith.addi %2, %c0_i32_11 : i32
    %c2_i32 = arith.constant 2 : i32
    %20 = arith.addi %19, %c2_i32 : i32
    %c0_12 = arith.constant 0 : index
    %21 = arith.index_cast %20 : i32 to index
    %c0_13 = arith.constant 0 : index
    %c0_14 = arith.constant 0 : index
    %22 = vector.load %arg2[%c0_12, %21, %c0_13, %c0_14] : memref<1x10x16x10xbf16, #tpu.memory_space<vmem>>, vector<1x1x16x10xbf16>
    %23 = vector.shape_cast %22 : vector<1x1x16x10xbf16> to vector<16x10xbf16>
    %24 = vector.extract_strided_slice %23 {offsets = [0, 0], sizes = [16, 8], strides = [1, 1]} : vector<16x10xbf16> to vector<16x8xbf16>
    %25 = vector.extract_strided_slice %23 {offsets = [0, 1], sizes = [16, 8], strides = [1, 1]} : vector<16x10xbf16> to vector<16x8xbf16>
    %26 = vector.extract_strided_slice %23 {offsets = [0, 2], sizes = [16, 8], strides = [1, 1]} : vector<16x10xbf16> to vector<16x8xbf16>
    %27 = tpu.concatenate %8, %9, %10, %16, %17, %18, %24, %25, %26 in 0 : vector<16x8xbf16>, vector<16x8xbf16>, vector<16x8xbf16>, vector<16x8xbf16>, vector<16x8xbf16>, vector<16x8xbf16>, vector<16x8xbf16>, vector<16x8xbf16>, vector<16x8xbf16> -> vector<144x8xbf16>
    %cst = arith.constant dense<0.000000e+00> : vector<8x8xf32>
    %28 = tpu.matmul %0, %27, %cst {dimension_numbers = #tpu.dot_dimension_numbers<[1], [0], [0], [1], [0, 0, 1, 1], [], []>} : vector<8x144xbf16>, vector<144x8xbf16>, vector<8x8xf32> -> vector<8x8xf32>
    %29 = vector.broadcast %1 : vector<8x1xf32> to vector<8x8xf32>
    %30 = arith.addf %28, %29 : vector<8x8xf32>
    %cst_15 = arith.constant 0.000000e+00 : f32
    %31 = vector.broadcast %cst_15 : f32 to vector<8x8xf32>
    %32 = arith.maximumf %30, %31 : vector<8x8xf32>
    %c1_i32_16 = arith.constant 1 : i32
    %33 = arith.addi %2, %c1_i32_16 : i32
    %c0_i32_17 = arith.constant 0 : i32
    %34 = arith.addi %33, %c0_i32_17 : i32
    %c0_18 = arith.constant 0 : index
    %35 = arith.index_cast %34 : i32 to index
    %c0_19 = arith.constant 0 : index
    %c0_20 = arith.constant 0 : index
    %36 = vector.load %arg2[%c0_18, %35, %c0_19, %c0_20] : memref<1x10x16x10xbf16, #tpu.memory_space<vmem>>, vector<1x1x16x10xbf16>
    %37 = vector.shape_cast %36 : vector<1x1x16x10xbf16> to vector<16x10xbf16>
    %38 = vector.extract_strided_slice %37 {offsets = [0, 0], sizes = [16, 8], strides = [1, 1]} : vector<16x10xbf16> to vector<16x8xbf16>
    %39 = vector.extract_strided_slice %37 {offsets = [0, 1], sizes = [16, 8], strides = [1, 1]} : vector<16x10xbf16> to vector<16x8xbf16>
    %40 = vector.extract_strided_slice %37 {offsets = [0, 2], sizes = [16, 8], strides = [1, 1]} : vector<16x10xbf16> to vector<16x8xbf16>
    %c1_i32_21 = arith.constant 1 : i32
    %41 = arith.addi %2, %c1_i32_21 : i32
    %c1_i32_22 = arith.constant 1 : i32
    %42 = arith.addi %41, %c1_i32_22 : i32
    %c0_23 = arith.constant 0 : index
    %43 = arith.index_cast %42 : i32 to index
    %c0_24 = arith.constant 0 : index
    %c0_25 = arith.constant 0 : index
    %44 = vector.load %arg2[%c0_23, %43, %c0_24, %c0_25] : memref<1x10x16x10xbf16, #tpu.memory_space<vmem>>, vector<1x1x16x10xbf16>
    %45 = vector.shape_cast %44 : vector<1x1x16x10xbf16> to vector<16x10xbf16>
    %46 = vector.extract_strided_slice %45 {offsets = [0, 0], sizes = [16, 8], strides = [1, 1]} : vector<16x10xbf16> to vector<16x8xbf16>
    %47 = vector.extract_strided_slice %45 {offsets = [0, 1], sizes = [16, 8], strides = [1, 1]} : vector<16x10xbf16> to vector<16x8xbf16>
    %48 = vector.extract_strided_slice %45 {offsets = [0, 2], sizes = [16, 8], strides = [1, 1]} : vector<16x10xbf16> to vector<16x8xbf16>
    %c1_i32_26 = arith.constant 1 : i32
    %49 = arith.addi %2, %c1_i32_26 : i32
    %c2_i32_27 = arith.constant 2 : i32
    %50 = arith.addi %49, %c2_i32_27 : i32
    %c0_28 = arith.constant 0 : index
    %51 = arith.index_cast %50 : i32 to index
    %c0_29 = arith.constant 0 : index
    %c0_30 = arith.constant 0 : index
    %52 = vector.load %arg2[%c0_28, %51, %c0_29, %c0_30] : memref<1x10x16x10xbf16, #tpu.memory_space<vmem>>, vector<1x1x16x10xbf16>
    %53 = vector.shape_cast %52 : vector<1x1x16x10xbf16> to vector<16x10xbf16>
    %54 = vector.extract_strided_slice %53 {offsets = [0, 0], sizes = [16, 8], strides = [1, 1]} : vector<16x10xbf16> to vector<16x8xbf16>
    %55 = vector.extract_strided_slice %53 {offsets = [0, 1], sizes = [16, 8], strides = [1, 1]} : vector<16x10xbf16> to vector<16x8xbf16>
    %56 = vector.extract_strided_slice %53 {offsets = [0, 2], sizes = [16, 8], strides = [1, 1]} : vector<16x10xbf16> to vector<16x8xbf16>
    %57 = tpu.concatenate %38, %39, %40, %46, %47, %48, %54, %55, %56 in 0 : vector<16x8xbf16>, vector<16x8xbf16>, vector<16x8xbf16>, vector<16x8xbf16>, vector<16x8xbf16>, vector<16x8xbf16>, vector<16x8xbf16>, vector<16x8xbf16>, vector<16x8xbf16> -> vector<144x8xbf16>
    %cst_31 = arith.constant dense<0.000000e+00> : vector<8x8xf32>
    %58 = tpu.matmul %0, %57, %cst_31 {dimension_numbers = #tpu.dot_dimension_numbers<[1], [0], [0], [1], [0, 0, 1, 1], [], []>} : vector<8x144xbf16>, vector<144x8xbf16>, vector<8x8xf32> -> vector<8x8xf32>
    %59 = vector.broadcast %1 : vector<8x1xf32> to vector<8x8xf32>
    %60 = arith.addf %58, %59 : vector<8x8xf32>
    %cst_32 = arith.constant 0.000000e+00 : f32
    %61 = vector.broadcast %cst_32 : f32 to vector<8x8xf32>
    %62 = arith.maximumf %60, %61 : vector<8x8xf32>
    %c2_i32_33 = arith.constant 2 : i32
    %63 = arith.addi %2, %c2_i32_33 : i32
    %c0_i32_34 = arith.constant 0 : i32
    %64 = arith.addi %63, %c0_i32_34 : i32
    %c0_35 = arith.constant 0 : index
    %65 = arith.index_cast %64 : i32 to index
    %c0_36 = arith.constant 0 : index
    %c0_37 = arith.constant 0 : index
    %66 = vector.load %arg2[%c0_35, %65, %c0_36, %c0_37] : memref<1x10x16x10xbf16, #tpu.memory_space<vmem>>, vector<1x1x16x10xbf16>
    %67 = vector.shape_cast %66 : vector<1x1x16x10xbf16> to vector<16x10xbf16>
    %68 = vector.extract_strided_slice %67 {offsets = [0, 0], sizes = [16, 8], strides = [1, 1]} : vector<16x10xbf16> to vector<16x8xbf16>
    %69 = vector.extract_strided_slice %67 {offsets = [0, 1], sizes = [16, 8], strides = [1, 1]} : vector<16x10xbf16> to vector<16x8xbf16>
    %70 = vector.extract_strided_slice %67 {offsets = [0, 2], sizes = [16, 8], strides = [1, 1]} : vector<16x10xbf16> to vector<16x8xbf16>
    %c2_i32_38 = arith.constant 2 : i32
    %71 = arith.addi %2, %c2_i32_38 : i32
    %c1_i32_39 = arith.constant 1 : i32
    %72 = arith.addi %71, %c1_i32_39 : i32
    %c0_40 = arith.constant 0 : index
    %73 = arith.index_cast %72 : i32 to index
    %c0_41 = arith.constant 0 : index
    %c0_42 = arith.constant 0 : index
    %74 = vector.load %arg2[%c0_40, %73, %c0_41, %c0_42] : memref<1x10x16x10xbf16, #tpu.memory_space<vmem>>, vector<1x1x16x10xbf16>
    %75 = vector.shape_cast %74 : vector<1x1x16x10xbf16> to vector<16x10xbf16>
    %76 = vector.extract_strided_slice %75 {offsets = [0, 0], sizes = [16, 8], strides = [1, 1]} : vector<16x10xbf16> to vector<16x8xbf16>
    %77 = vector.extract_strided_slice %75 {offsets = [0, 1], sizes = [16, 8], strides = [1, 1]} : vector<16x10xbf16> to vector<16x8xbf16>
    %78 = vector.extract_strided_slice %75 {offsets = [0, 2], sizes = [16, 8], strides = [1, 1]} : vector<16x10xbf16> to vector<16x8xbf16>
    %c2_i32_43 = arith.constant 2 : i32
    %79 = arith.addi %2, %c2_i32_43 : i32
    %c2_i32_44 = arith.constant 2 : i32
    %80 = arith.addi %79, %c2_i32_44 : i32
    %c0_45 = arith.constant 0 : index
    %81 = arith.index_cast %80 : i32 to index
    %c0_46 = arith.constant 0 : index
    %c0_47 = arith.constant 0 : index
    %82 = vector.load %arg2[%c0_45, %81, %c0_46, %c0_47] : memref<1x10x16x10xbf16, #tpu.memory_space<vmem>>, vector<1x1x16x10xbf16>
    %83 = vector.shape_cast %82 : vector<1x1x16x10xbf16> to vector<16x10xbf16>
    %84 = vector.extract_strided_slice %83 {offsets = [0, 0], sizes = [16, 8], strides = [1, 1]} : vector<16x10xbf16> to vector<16x8xbf16>
    %85 = vector.extract_strided_slice %83 {offsets = [0, 1], sizes = [16, 8], strides = [1, 1]} : vector<16x10xbf16> to vector<16x8xbf16>
    %86 = vector.extract_strided_slice %83 {offsets = [0, 2], sizes = [16, 8], strides = [1, 1]} : vector<16x10xbf16> to vector<16x8xbf16>
    %87 = tpu.concatenate %68, %69, %70, %76, %77, %78, %84, %85, %86 in 0 : vector<16x8xbf16>, vector<16x8xbf16>, vector<16x8xbf16>, vector<16x8xbf16>, vector<16x8xbf16>, vector<16x8xbf16>, vector<16x8xbf16>, vector<16x8xbf16>, vector<16x8xbf16> -> vector<144x8xbf16>
    %cst_48 = arith.constant dense<0.000000e+00> : vector<8x8xf32>
    %88 = tpu.matmul %0, %87, %cst_48 {dimension_numbers = #tpu.dot_dimension_numbers<[1], [0], [0], [1], [0, 0, 1, 1], [], []>} : vector<8x144xbf16>, vector<144x8xbf16>, vector<8x8xf32> -> vector<8x8xf32>
    %89 = vector.broadcast %1 : vector<8x1xf32> to vector<8x8xf32>
    %90 = arith.addf %88, %89 : vector<8x8xf32>
    %cst_49 = arith.constant 0.000000e+00 : f32
    %91 = vector.broadcast %cst_49 : f32 to vector<8x8xf32>
    %92 = arith.maximumf %90, %91 : vector<8x8xf32>
    %c3_i32 = arith.constant 3 : i32
    %93 = arith.addi %2, %c3_i32 : i32
    %c0_i32_50 = arith.constant 0 : i32
    %94 = arith.addi %93, %c0_i32_50 : i32
    %c0_51 = arith.constant 0 : index
    %95 = arith.index_cast %94 : i32 to index
    %c0_52 = arith.constant 0 : index
    %c0_53 = arith.constant 0 : index
    %96 = vector.load %arg2[%c0_51, %95, %c0_52, %c0_53] : memref<1x10x16x10xbf16, #tpu.memory_space<vmem>>, vector<1x1x16x10xbf16>
    %97 = vector.shape_cast %96 : vector<1x1x16x10xbf16> to vector<16x10xbf16>
    %98 = vector.extract_strided_slice %97 {offsets = [0, 0], sizes = [16, 8], strides = [1, 1]} : vector<16x10xbf16> to vector<16x8xbf16>
    %99 = vector.extract_strided_slice %97 {offsets = [0, 1], sizes = [16, 8], strides = [1, 1]} : vector<16x10xbf16> to vector<16x8xbf16>
    %100 = vector.extract_strided_slice %97 {offsets = [0, 2], sizes = [16, 8], strides = [1, 1]} : vector<16x10xbf16> to vector<16x8xbf16>
    %c3_i32_54 = arith.constant 3 : i32
    %101 = arith.addi %2, %c3_i32_54 : i32
    %c1_i32_55 = arith.constant 1 : i32
    %102 = arith.addi %101, %c1_i32_55 : i32
    %c0_56 = arith.constant 0 : index
    %103 = arith.index_cast %102 : i32 to index
    %c0_57 = arith.constant 0 : index
    %c0_58 = arith.constant 0 : index
    %104 = vector.load %arg2[%c0_56, %103, %c0_57, %c0_58] : memref<1x10x16x10xbf16, #tpu.memory_space<vmem>>, vector<1x1x16x10xbf16>
    %105 = vector.shape_cast %104 : vector<1x1x16x10xbf16> to vector<16x10xbf16>
    %106 = vector.extract_strided_slice %105 {offsets = [0, 0], sizes = [16, 8], strides = [1, 1]} : vector<16x10xbf16> to vector<16x8xbf16>
    %107 = vector.extract_strided_slice %105 {offsets = [0, 1], sizes = [16, 8], strides = [1, 1]} : vector<16x10xbf16> to vector<16x8xbf16>
    %108 = vector.extract_strided_slice %105 {offsets = [0, 2], sizes = [16, 8], strides = [1, 1]} : vector<16x10xbf16> to vector<16x8xbf16>
    %c3_i32_59 = arith.constant 3 : i32
    %109 = arith.addi %2, %c3_i32_59 : i32
    %c2_i32_60 = arith.constant 2 : i32
    %110 = arith.addi %109, %c2_i32_60 : i32
    %c0_61 = arith.constant 0 : index
    %111 = arith.index_cast %110 : i32 to index
    %c0_62 = arith.constant 0 : index
    %c0_63 = arith.constant 0 : index
    %112 = vector.load %arg2[%c0_61, %111, %c0_62, %c0_63] : memref<1x10x16x10xbf16, #tpu.memory_space<vmem>>, vector<1x1x16x10xbf16>
    %113 = vector.shape_cast %112 : vector<1x1x16x10xbf16> to vector<16x10xbf16>
    %114 = vector.extract_strided_slice %113 {offsets = [0, 0], sizes = [16, 8], strides = [1, 1]} : vector<16x10xbf16> to vector<16x8xbf16>
    %115 = vector.extract_strided_slice %113 {offsets = [0, 1], sizes = [16, 8], strides = [1, 1]} : vector<16x10xbf16> to vector<16x8xbf16>
    %116 = vector.extract_strided_slice %113 {offsets = [0, 2], sizes = [16, 8], strides = [1, 1]} : vector<16x10xbf16> to vector<16x8xbf16>
    %117 = tpu.concatenate %98, %99, %100, %106, %107, %108, %114, %115, %116 in 0 : vector<16x8xbf16>, vector<16x8xbf16>, vector<16x8xbf16>, vector<16x8xbf16>, vector<16x8xbf16>, vector<16x8xbf16>, vector<16x8xbf16>, vector<16x8xbf16>, vector<16x8xbf16> -> vector<144x8xbf16>
    %cst_64 = arith.constant dense<0.000000e+00> : vector<8x8xf32>
    %118 = tpu.matmul %0, %117, %cst_64 {dimension_numbers = #tpu.dot_dimension_numbers<[1], [0], [0], [1], [0, 0, 1, 1], [], []>} : vector<8x144xbf16>, vector<144x8xbf16>, vector<8x8xf32> -> vector<8x8xf32>
    %119 = vector.broadcast %1 : vector<8x1xf32> to vector<8x8xf32>
    %120 = arith.addf %118, %119 : vector<8x8xf32>
    %cst_65 = arith.constant 0.000000e+00 : f32
    %121 = vector.broadcast %cst_65 : f32 to vector<8x8xf32>
    %122 = arith.maximumf %120, %121 : vector<8x8xf32>
    %c4_i32 = arith.constant 4 : i32
    %123 = arith.addi %2, %c4_i32 : i32
    %c0_i32_66 = arith.constant 0 : i32
    %124 = arith.addi %123, %c0_i32_66 : i32
    %c0_67 = arith.constant 0 : index
    %125 = arith.index_cast %124 : i32 to index
    %c0_68 = arith.constant 0 : index
    %c0_69 = arith.constant 0 : index
    %126 = vector.load %arg2[%c0_67, %125, %c0_68, %c0_69] : memref<1x10x16x10xbf16, #tpu.memory_space<vmem>>, vector<1x1x16x10xbf16>
    %127 = vector.shape_cast %126 : vector<1x1x16x10xbf16> to vector<16x10xbf16>
    %128 = vector.extract_strided_slice %127 {offsets = [0, 0], sizes = [16, 8], strides = [1, 1]} : vector<16x10xbf16> to vector<16x8xbf16>
    %129 = vector.extract_strided_slice %127 {offsets = [0, 1], sizes = [16, 8], strides = [1, 1]} : vector<16x10xbf16> to vector<16x8xbf16>
    %130 = vector.extract_strided_slice %127 {offsets = [0, 2], sizes = [16, 8], strides = [1, 1]} : vector<16x10xbf16> to vector<16x8xbf16>
    %c4_i32_70 = arith.constant 4 : i32
    %131 = arith.addi %2, %c4_i32_70 : i32
    %c1_i32_71 = arith.constant 1 : i32
    %132 = arith.addi %131, %c1_i32_71 : i32
    %c0_72 = arith.constant 0 : index
    %133 = arith.index_cast %132 : i32 to index
    %c0_73 = arith.constant 0 : index
    %c0_74 = arith.constant 0 : index
    %134 = vector.load %arg2[%c0_72, %133, %c0_73, %c0_74] : memref<1x10x16x10xbf16, #tpu.memory_space<vmem>>, vector<1x1x16x10xbf16>
    %135 = vector.shape_cast %134 : vector<1x1x16x10xbf16> to vector<16x10xbf16>
    %136 = vector.extract_strided_slice %135 {offsets = [0, 0], sizes = [16, 8], strides = [1, 1]} : vector<16x10xbf16> to vector<16x8xbf16>
    %137 = vector.extract_strided_slice %135 {offsets = [0, 1], sizes = [16, 8], strides = [1, 1]} : vector<16x10xbf16> to vector<16x8xbf16>
    %138 = vector.extract_strided_slice %135 {offsets = [0, 2], sizes = [16, 8], strides = [1, 1]} : vector<16x10xbf16> to vector<16x8xbf16>
    %c4_i32_75 = arith.constant 4 : i32
    %139 = arith.addi %2, %c4_i32_75 : i32
    %c2_i32_76 = arith.constant 2 : i32
    %140 = arith.addi %139, %c2_i32_76 : i32
    %c0_77 = arith.constant 0 : index
    %141 = arith.index_cast %140 : i32 to index
    %c0_78 = arith.constant 0 : index
    %c0_79 = arith.constant 0 : index
    %142 = vector.load %arg2[%c0_77, %141, %c0_78, %c0_79] : memref<1x10x16x10xbf16, #tpu.memory_space<vmem>>, vector<1x1x16x10xbf16>
    %143 = vector.shape_cast %142 : vector<1x1x16x10xbf16> to vector<16x10xbf16>
    %144 = vector.extract_strided_slice %143 {offsets = [0, 0], sizes = [16, 8], strides = [1, 1]} : vector<16x10xbf16> to vector<16x8xbf16>
    %145 = vector.extract_strided_slice %143 {offsets = [0, 1], sizes = [16, 8], strides = [1, 1]} : vector<16x10xbf16> to vector<16x8xbf16>
    %146 = vector.extract_strided_slice %143 {offsets = [0, 2], sizes = [16, 8], strides = [1, 1]} : vector<16x10xbf16> to vector<16x8xbf16>
    %147 = tpu.concatenate %128, %129, %130, %136, %137, %138, %144, %145, %146 in 0 : vector<16x8xbf16>, vector<16x8xbf16>, vector<16x8xbf16>, vector<16x8xbf16>, vector<16x8xbf16>, vector<16x8xbf16>, vector<16x8xbf16>, vector<16x8xbf16>, vector<16x8xbf16> -> vector<144x8xbf16>
    %cst_80 = arith.constant dense<0.000000e+00> : vector<8x8xf32>
    %148 = tpu.matmul %0, %147, %cst_80 {dimension_numbers = #tpu.dot_dimension_numbers<[1], [0], [0], [1], [0, 0, 1, 1], [], []>} : vector<8x144xbf16>, vector<144x8xbf16>, vector<8x8xf32> -> vector<8x8xf32>
    %149 = vector.broadcast %1 : vector<8x1xf32> to vector<8x8xf32>
    %150 = arith.addf %148, %149 : vector<8x8xf32>
    %cst_81 = arith.constant 0.000000e+00 : f32
    %151 = vector.broadcast %cst_81 : f32 to vector<8x8xf32>
    %152 = arith.maximumf %150, %151 : vector<8x8xf32>
    %c5_i32 = arith.constant 5 : i32
    %153 = arith.addi %2, %c5_i32 : i32
    %c0_i32_82 = arith.constant 0 : i32
    %154 = arith.addi %153, %c0_i32_82 : i32
    %c0_83 = arith.constant 0 : index
    %155 = arith.index_cast %154 : i32 to index
    %c0_84 = arith.constant 0 : index
    %c0_85 = arith.constant 0 : index
    %156 = vector.load %arg2[%c0_83, %155, %c0_84, %c0_85] : memref<1x10x16x10xbf16, #tpu.memory_space<vmem>>, vector<1x1x16x10xbf16>
    %157 = vector.shape_cast %156 : vector<1x1x16x10xbf16> to vector<16x10xbf16>
    %158 = vector.extract_strided_slice %157 {offsets = [0, 0], sizes = [16, 8], strides = [1, 1]} : vector<16x10xbf16> to vector<16x8xbf16>
    %159 = vector.extract_strided_slice %157 {offsets = [0, 1], sizes = [16, 8], strides = [1, 1]} : vector<16x10xbf16> to vector<16x8xbf16>
    %160 = vector.extract_strided_slice %157 {offsets = [0, 2], sizes = [16, 8], strides = [1, 1]} : vector<16x10xbf16> to vector<16x8xbf16>
    %c5_i32_86 = arith.constant 5 : i32
    %161 = arith.addi %2, %c5_i32_86 : i32
    %c1_i32_87 = arith.constant 1 : i32
    %162 = arith.addi %161, %c1_i32_87 : i32
    %c0_88 = arith.constant 0 : index
    %163 = arith.index_cast %162 : i32 to index
    %c0_89 = arith.constant 0 : index
    %c0_90 = arith.constant 0 : index
    %164 = vector.load %arg2[%c0_88, %163, %c0_89, %c0_90] : memref<1x10x16x10xbf16, #tpu.memory_space<vmem>>, vector<1x1x16x10xbf16>
    %165 = vector.shape_cast %164 : vector<1x1x16x10xbf16> to vector<16x10xbf16>
    %166 = vector.extract_strided_slice %165 {offsets = [0, 0], sizes = [16, 8], strides = [1, 1]} : vector<16x10xbf16> to vector<16x8xbf16>
    %167 = vector.extract_strided_slice %165 {offsets = [0, 1], sizes = [16, 8], strides = [1, 1]} : vector<16x10xbf16> to vector<16x8xbf16>
    %168 = vector.extract_strided_slice %165 {offsets = [0, 2], sizes = [16, 8], strides = [1, 1]} : vector<16x10xbf16> to vector<16x8xbf16>
    %c5_i32_91 = arith.constant 5 : i32
    %169 = arith.addi %2, %c5_i32_91 : i32
    %c2_i32_92 = arith.constant 2 : i32
    %170 = arith.addi %169, %c2_i32_92 : i32
    %c0_93 = arith.constant 0 : index
    %171 = arith.index_cast %170 : i32 to index
    %c0_94 = arith.constant 0 : index
    %c0_95 = arith.constant 0 : index
    %172 = vector.load %arg2[%c0_93, %171, %c0_94, %c0_95] : memref<1x10x16x10xbf16, #tpu.memory_space<vmem>>, vector<1x1x16x10xbf16>
    %173 = vector.shape_cast %172 : vector<1x1x16x10xbf16> to vector<16x10xbf16>
    %174 = vector.extract_strided_slice %173 {offsets = [0, 0], sizes = [16, 8], strides = [1, 1]} : vector<16x10xbf16> to vector<16x8xbf16>
    %175 = vector.extract_strided_slice %173 {offsets = [0, 1], sizes = [16, 8], strides = [1, 1]} : vector<16x10xbf16> to vector<16x8xbf16>
    %176 = vector.extract_strided_slice %173 {offsets = [0, 2], sizes = [16, 8], strides = [1, 1]} : vector<16x10xbf16> to vector<16x8xbf16>
    %177 = tpu.concatenate %158, %159, %160, %166, %167, %168, %174, %175, %176 in 0 : vector<16x8xbf16>, vector<16x8xbf16>, vector<16x8xbf16>, vector<16x8xbf16>, vector<16x8xbf16>, vector<16x8xbf16>, vector<16x8xbf16>, vector<16x8xbf16>, vector<16x8xbf16> -> vector<144x8xbf16>
    %cst_96 = arith.constant dense<0.000000e+00> : vector<8x8xf32>
    %178 = tpu.matmul %0, %177, %cst_96 {dimension_numbers = #tpu.dot_dimension_numbers<[1], [0], [0], [1], [0, 0, 1, 1], [], []>} : vector<8x144xbf16>, vector<144x8xbf16>, vector<8x8xf32> -> vector<8x8xf32>
    %179 = vector.broadcast %1 : vector<8x1xf32> to vector<8x8xf32>
    %180 = arith.addf %178, %179 : vector<8x8xf32>
    %cst_97 = arith.constant 0.000000e+00 : f32
    %181 = vector.broadcast %cst_97 : f32 to vector<8x8xf32>
    %182 = arith.maximumf %180, %181 : vector<8x8xf32>
    %c6_i32 = arith.constant 6 : i32
    %183 = arith.addi %2, %c6_i32 : i32
    %c0_i32_98 = arith.constant 0 : i32
    %184 = arith.addi %183, %c0_i32_98 : i32
    %c0_99 = arith.constant 0 : index
    %185 = arith.index_cast %184 : i32 to index
    %c0_100 = arith.constant 0 : index
    %c0_101 = arith.constant 0 : index
    %186 = vector.load %arg2[%c0_99, %185, %c0_100, %c0_101] : memref<1x10x16x10xbf16, #tpu.memory_space<vmem>>, vector<1x1x16x10xbf16>
    %187 = vector.shape_cast %186 : vector<1x1x16x10xbf16> to vector<16x10xbf16>
    %188 = vector.extract_strided_slice %187 {offsets = [0, 0], sizes = [16, 8], strides = [1, 1]} : vector<16x10xbf16> to vector<16x8xbf16>
    %189 = vector.extract_strided_slice %187 {offsets = [0, 1], sizes = [16, 8], strides = [1, 1]} : vector<16x10xbf16> to vector<16x8xbf16>
    %190 = vector.extract_strided_slice %187 {offsets = [0, 2], sizes = [16, 8], strides = [1, 1]} : vector<16x10xbf16> to vector<16x8xbf16>
    %c6_i32_102 = arith.constant 6 : i32
    %191 = arith.addi %2, %c6_i32_102 : i32
    %c1_i32_103 = arith.constant 1 : i32
    %192 = arith.addi %191, %c1_i32_103 : i32
    %c0_104 = arith.constant 0 : index
    %193 = arith.index_cast %192 : i32 to index
    %c0_105 = arith.constant 0 : index
    %c0_106 = arith.constant 0 : index
    %194 = vector.load %arg2[%c0_104, %193, %c0_105, %c0_106] : memref<1x10x16x10xbf16, #tpu.memory_space<vmem>>, vector<1x1x16x10xbf16>
    %195 = vector.shape_cast %194 : vector<1x1x16x10xbf16> to vector<16x10xbf16>
    %196 = vector.extract_strided_slice %195 {offsets = [0, 0], sizes = [16, 8], strides = [1, 1]} : vector<16x10xbf16> to vector<16x8xbf16>
    %197 = vector.extract_strided_slice %195 {offsets = [0, 1], sizes = [16, 8], strides = [1, 1]} : vector<16x10xbf16> to vector<16x8xbf16>
    %198 = vector.extract_strided_slice %195 {offsets = [0, 2], sizes = [16, 8], strides = [1, 1]} : vector<16x10xbf16> to vector<16x8xbf16>
    %c6_i32_107 = arith.constant 6 : i32
    %199 = arith.addi %2, %c6_i32_107 : i32
    %c2_i32_108 = arith.constant 2 : i32
    %200 = arith.addi %199, %c2_i32_108 : i32
    %c0_109 = arith.constant 0 : index
    %201 = arith.index_cast %200 : i32 to index
    %c0_110 = arith.constant 0 : index
    %c0_111 = arith.constant 0 : index
    %202 = vector.load %arg2[%c0_109, %201, %c0_110, %c0_111] : memref<1x10x16x10xbf16, #tpu.memory_space<vmem>>, vector<1x1x16x10xbf16>
    %203 = vector.shape_cast %202 : vector<1x1x16x10xbf16> to vector<16x10xbf16>
    %204 = vector.extract_strided_slice %203 {offsets = [0, 0], sizes = [16, 8], strides = [1, 1]} : vector<16x10xbf16> to vector<16x8xbf16>
    %205 = vector.extract_strided_slice %203 {offsets = [0, 1], sizes = [16, 8], strides = [1, 1]} : vector<16x10xbf16> to vector<16x8xbf16>
    %206 = vector.extract_strided_slice %203 {offsets = [0, 2], sizes = [16, 8], strides = [1, 1]} : vector<16x10xbf16> to vector<16x8xbf16>
    %207 = tpu.concatenate %188, %189, %190, %196, %197, %198, %204, %205, %206 in 0 : vector<16x8xbf16>, vector<16x8xbf16>, vector<16x8xbf16>, vector<16x8xbf16>, vector<16x8xbf16>, vector<16x8xbf16>, vector<16x8xbf16>, vector<16x8xbf16>, vector<16x8xbf16> -> vector<144x8xbf16>
    %cst_112 = arith.constant dense<0.000000e+00> : vector<8x8xf32>
    %208 = tpu.matmul %0, %207, %cst_112 {dimension_numbers = #tpu.dot_dimension_numbers<[1], [0], [0], [1], [0, 0, 1, 1], [], []>} : vector<8x144xbf16>, vector<144x8xbf16>, vector<8x8xf32> -> vector<8x8xf32>
    %209 = vector.broadcast %1 : vector<8x1xf32> to vector<8x8xf32>
    %210 = arith.addf %208, %209 : vector<8x8xf32>
    %cst_113 = arith.constant 0.000000e+00 : f32
    %211 = vector.broadcast %cst_113 : f32 to vector<8x8xf32>
    %212 = arith.maximumf %210, %211 : vector<8x8xf32>
    %c7_i32 = arith.constant 7 : i32
    %213 = arith.addi %2, %c7_i32 : i32
    %c0_i32_114 = arith.constant 0 : i32
    %214 = arith.addi %213, %c0_i32_114 : i32
    %c0_115 = arith.constant 0 : index
    %215 = arith.index_cast %214 : i32 to index
    %c0_116 = arith.constant 0 : index
    %c0_117 = arith.constant 0 : index
    %216 = vector.load %arg2[%c0_115, %215, %c0_116, %c0_117] : memref<1x10x16x10xbf16, #tpu.memory_space<vmem>>, vector<1x1x16x10xbf16>
    %217 = vector.shape_cast %216 : vector<1x1x16x10xbf16> to vector<16x10xbf16>
    %218 = vector.extract_strided_slice %217 {offsets = [0, 0], sizes = [16, 8], strides = [1, 1]} : vector<16x10xbf16> to vector<16x8xbf16>
    %219 = vector.extract_strided_slice %217 {offsets = [0, 1], sizes = [16, 8], strides = [1, 1]} : vector<16x10xbf16> to vector<16x8xbf16>
    %220 = vector.extract_strided_slice %217 {offsets = [0, 2], sizes = [16, 8], strides = [1, 1]} : vector<16x10xbf16> to vector<16x8xbf16>
    %c7_i32_118 = arith.constant 7 : i32
    %221 = arith.addi %2, %c7_i32_118 : i32
    %c1_i32_119 = arith.constant 1 : i32
    %222 = arith.addi %221, %c1_i32_119 : i32
    %c0_120 = arith.constant 0 : index
    %223 = arith.index_cast %222 : i32 to index
    %c0_121 = arith.constant 0 : index
    %c0_122 = arith.constant 0 : index
    %224 = vector.load %arg2[%c0_120, %223, %c0_121, %c0_122] : memref<1x10x16x10xbf16, #tpu.memory_space<vmem>>, vector<1x1x16x10xbf16>
    %225 = vector.shape_cast %224 : vector<1x1x16x10xbf16> to vector<16x10xbf16>
    %226 = vector.extract_strided_slice %225 {offsets = [0, 0], sizes = [16, 8], strides = [1, 1]} : vector<16x10xbf16> to vector<16x8xbf16>
    %227 = vector.extract_strided_slice %225 {offsets = [0, 1], sizes = [16, 8], strides = [1, 1]} : vector<16x10xbf16> to vector<16x8xbf16>
    %228 = vector.extract_strided_slice %225 {offsets = [0, 2], sizes = [16, 8], strides = [1, 1]} : vector<16x10xbf16> to vector<16x8xbf16>
    %c7_i32_123 = arith.constant 7 : i32
    %229 = arith.addi %2, %c7_i32_123 : i32
    %c2_i32_124 = arith.constant 2 : i32
    %230 = arith.addi %229, %c2_i32_124 : i32
    %c0_125 = arith.constant 0 : index
    %231 = arith.index_cast %230 : i32 to index
    %c0_126 = arith.constant 0 : index
    %c0_127 = arith.constant 0 : index
    %232 = vector.load %arg2[%c0_125, %231, %c0_126, %c0_127] : memref<1x10x16x10xbf16, #tpu.memory_space<vmem>>, vector<1x1x16x10xbf16>
    %233 = vector.shape_cast %232 : vector<1x1x16x10xbf16> to vector<16x10xbf16>
    %234 = vector.extract_strided_slice %233 {offsets = [0, 0], sizes = [16, 8], strides = [1, 1]} : vector<16x10xbf16> to vector<16x8xbf16>
    %235 = vector.extract_strided_slice %233 {offsets = [0, 1], sizes = [16, 8], strides = [1, 1]} : vector<16x10xbf16> to vector<16x8xbf16>
    %236 = vector.extract_strided_slice %233 {offsets = [0, 2], sizes = [16, 8], strides = [1, 1]} : vector<16x10xbf16> to vector<16x8xbf16>
    %237 = tpu.concatenate %218, %219, %220, %226, %227, %228, %234, %235, %236 in 0 : vector<16x8xbf16>, vector<16x8xbf16>, vector<16x8xbf16>, vector<16x8xbf16>, vector<16x8xbf16>, vector<16x8xbf16>, vector<16x8xbf16>, vector<16x8xbf16>, vector<16x8xbf16> -> vector<144x8xbf16>
    %cst_128 = arith.constant dense<0.000000e+00> : vector<8x8xf32>
    %238 = tpu.matmul %0, %237, %cst_128 {dimension_numbers = #tpu.dot_dimension_numbers<[1], [0], [0], [1], [0, 0, 1, 1], [], []>} : vector<8x144xbf16>, vector<144x8xbf16>, vector<8x8xf32> -> vector<8x8xf32>
    %239 = vector.broadcast %1 : vector<8x1xf32> to vector<8x8xf32>
    %240 = arith.addf %238, %239 : vector<8x8xf32>
    %cst_129 = arith.constant 0.000000e+00 : f32
    %241 = vector.broadcast %cst_129 : f32 to vector<8x8xf32>
    %242 = arith.maximumf %240, %241 : vector<8x8xf32>
    %243 = tpu.concatenate %32, %62, %92, %122, %152, %182, %212, %242 in 1 : vector<8x8xf32>, vector<8x8xf32>, vector<8x8xf32>, vector<8x8xf32>, vector<8x8xf32>, vector<8x8xf32>, vector<8x8xf32>, vector<8x8xf32> -> vector<8x64xf32>
    %c0_130 = arith.constant 0 : index
    %c0_131 = arith.constant 0 : index
    %c0_132 = arith.constant 0 : index
    %244 = vector.load %arg5[%c0_130, %c0_131, %c0_132] : memref<1x8x64xf32, #tpu.memory_space<vmem>>, vector<1x8x64xf32>
    %245 = vector.shape_cast %244 : vector<1x8x64xf32> to vector<8x64xf32>
    %246 = vector.shape_cast %243 : vector<8x64xf32> to vector<1x8x64xf32>
    tpu.vector_store %arg5[%c0_130, %c0_131, %c0_132], %246 {strides = array<i32>} : memref<1x8x64xf32, #tpu.memory_space<vmem>>, vector<1x8x64xf32>,
    return
  }
  func.func @transform_0(%arg0: i32, %arg1: i32) -> (i32, i32, i32, i32) {
    %c0_i32 = arith.constant 0 : i32
    %c0_i32_0 = arith.constant 0 : i32
    %c0_i32_1 = arith.constant 0 : i32
    %c0_i32_2 = arith.constant 0 : i32
    return %arg0, %c0_i32, %c0_i32_0, %c0_i32_1 : i32, i32, i32, i32
  }
  func.func @transform_1(%arg0: i32, %arg1: i32) -> (i32, i32) {
    %c0_i32 = arith.constant 0 : i32
    %c0_i32_0 = arith.constant 0 : i32
    %c0_i32_1 = arith.constant 0 : i32
    return %c0_i32, %c0_i32_0 : i32, i32
  }
  func.func @transform_2(%arg0: i32, %arg1: i32) -> (i32, i32) {
    %c0_i32 = arith.constant 0 : i32
    %c0_i32_0 = arith.constant 0 : i32
    %c0_i32_1 = arith.constant 0 : i32
    return %c0_i32, %c0_i32_0 : i32, i32
  }
  func.func @transform_3(%arg0: i32, %arg1: i32) -> (i32, i32, i32) {
    %c0_i32 = arith.constant 0 : i32
    %c0_i32_0 = arith.constant 0 : i32
    return %arg0, %c0_i32, %arg1 : i32, i32, i32
  }
}

</mosaic_0001>

<llo_original>
// kernel: tpu_custom_call.1
$region0: #{tpu_custom_call.1}
  #allocation0 [shape = 'u32[]', space=smem, size = 0x4, offset = 0x4, fixed_abs, tag = 'smem constant byte address 0x4 - core index']
  #allocation1 [shape = 'u32[144,128]{1,0:T(1,128)}', space=vmem, size = 0x12000, scoped, tag = 'internal scratch']
  %s0 = inlined_call_operand.vmem [shape: bf16[2,10,16,10], index: 0, kind: input, shape index: {}]
  %s1 = inlined_call_operand.vmem [shape: bf16[8,144], index: 1, kind: input, shape index: {}]
  %s2 = inlined_call_operand.vmem [shape: f32[8,1], index: 2, kind: input, shape index: {}]
  %s3 = inlined_call_operand.hbm [shape: f32[2,8,64], index: 3, kind: output, shape index: {}]
  %s4 = sld [smem:[#allocation0]]
  $region45: #{tpu_custom_call.1} parent=0
    _
  %s6 = ssub.s32 1, %s4
  %s7 = scalar_select 0, %s6, %s4
  $region1: #{tpu_custom_call.1} parent=0
    #allocation2 [shape = 'u8[8192]{0}', space=vmem, size = 0x2000, scoped, tag = 'output window, operand 0']
    #allocation3 [shape = 's32[2]{0}', space=sflag, size = 0x8, scoped, tag = 'scoped memory for tpu_custom_call.1']
    %8 = vsyncpa [#allocation3], 0
    %s9 = scalar_lea.sflag [#allocation3], 1
    %10 = vsyncpa %s9, 0
    loop: start=0, step=1, limit=4
    $region2: #{tpu_custom_call.1} parent=1 // loop_pre_header
      _
    $region3: #{tpu_custom_call.1} parent=1 // loop_header
      %s12 = sphi 0, %s16
      %p13 = scmp.ge.s32.totalorder %s12, 4
      %s19 = sphi 0, %s31
      %s20 = sphi 0, %s27
      %s21 = sphi 0, %s19
      %s22 = sphi 0, %s20
      %s23 = sphi 0, %s21
      %s24 = sphi 0, %s22
      %s34 = sphi 0, %s36
      %s37 = sphi 0, %s34
      %s38 = sphi 0, %s37
      %s54 = sphi 0, %s38
      %s58 = sphi 0, %s58
      %s60 = sphi 0, %s58
      %s61 = sphi 0, %s60
      %s75 = sphi 0, %s61
      %s79 = sphi 0, %s79
      %s81 = sphi 0, %s79
      %s82 = sphi 0, %s81
      %s96 = sphi 0, %s82
      %s104 = sphi 0, %s106
      %s107 = sphi 0, %s104
      %s108 = sphi 0, %s107
      %s124 = sphi 0, %s108
    $region4: #{tpu_custom_call.1} parent=1 // loop_header_branch
      %15 = sbr.rel (%p13) target = $region8
    $region5: #{tpu_custom_call.1} parent=1 // loop_body
      %s17 = ssub.s32 %s12, 1
      %s18 = ssub.s32 %s12, 2
      %s25 = sadd.s32 1, %s20
      %p26 = scmp.ge.s32.totalorder %s25, 1
      %s27 = scalar_select %p26, 0, %s25
      %s28 = sadd.s32 1, %s19
      %s29 = scalar_select %p26, %s28, %s19
      %p30 = scmp.ge.s32.totalorder %s29, 2
      %s31 = scalar_select %p30, 0, %s29
      %s32 = ssub.s32 %s19, %s31
      %p33 = scmp.eq.s32.totalorder %s32, 0
      %s35 = sadd.s32 %s34, 1
      %s36 = scalar_select %p33, %s34, %s35
      %p39 = pneg %p33
      %p40 = scmp.eq.s32.totalorder %s12, 1
      %p41 = por %p39, %p40
      %p42 = scmp.ne.s32.totalorder %s34, %s37
      %p43 = scmp.eq.s32.totalorder %s12, 0
      %p44 = por %p42, %p43
      %p45 = scmp.ne.s32.totalorder %s34, %s37
      %p46 = scmp.eq.s32.totalorder %s17, 1
      %p47 = por %p45, %p46
      %p48 = scmp.ne.s32.totalorder %s37, %s38
      %p49 = scmp.eq.s32.totalorder %s17, 0
      %p50 = por %p48, %p49
      %p51 = scmp.ne.s32.totalorder %s37, %s38
      %p52 = scmp.eq.s32.totalorder %s18, 1
      %p53 = por %p51, %p52
      %p55 = scmp.ne.s32.totalorder %s38, %s54
      %p56 = scmp.eq.s32.totalorder %s18, 0
      %p57 = por %p55, %p56
      %s59 = sadd.s32 %s58, 1
      %p62 = scmp.eq.s32.totalorder %s12, 1
      %p63 = scmp.ne.s32.totalorder %s58, %s60
      %p64 = scmp.eq.s32.totalorder %s12, 0
      %p65 = por %p63, %p64
      %p66 = scmp.ne.s32.totalorder %s58, %s60
      %p67 = scmp.eq.s32.totalorder %s17, 1
      %p68 = por %p66, %p67
      %p69 = scmp.ne.s32.totalorder %s60, %s61
      %p70 = scmp.eq.s32.totalorder %s17, 0
      %p71 = por %p69, %p70
      %p72 = scmp.ne.s32.totalorder %s60, %s61
      %p73 = scmp.eq.s32.totalorder %s18, 1
      %p74 = por %p72, %p73
      %p76 = scmp.ne.s32.totalorder %s61, %s75
      %p77 = scmp.eq.s32.totalorder %s18, 0
      %p78 = por %p76, %p77
      %s80 = sadd.s32 %s79, 1
      %p83 = scmp.eq.s32.totalorder %s12, 1
      %p84 = scmp.ne.s32.totalorder %s79, %s81
      %p85 = scmp.eq.s32.totalorder %s12, 0
      %p86 = por %p84, %p85
      %p87 = scmp.ne.s32.totalorder %s79, %s81
      %p88 = scmp.eq.s32.totalorder %s17, 1
      %p89 = por %p87, %p88
      %p90 = scmp.ne.s32.totalorder %s81, %s82
      %p91 = scmp.eq.s32.totalorder %s17, 0
      %p92 = por %p90, %p91
      %p93 = scmp.ne.s32.totalorder %s81, %s82
      %p94 = scmp.eq.s32.totalorder %s18, 1
      %p95 = por %p93, %p94
      %p97 = scmp.ne.s32.totalorder %s82, %s96
      %p98 = scmp.eq.s32.totalorder %s18, 0
      %p99 = por %p97, %p98
      %s100 = ssub.s32 %s19, %s31
      %s101 = ssub.s32 %s20, %s27
      %s102 = sor.u32 %s100, %s101
      %p103 = scmp.eq.s32.totalorder %s102, 0
      %s105 = sadd.s32 %s104, 1
      %s106 = scalar_select %p103, %s104, %s105
      %p109 = pneg %p103
      %p110 = scmp.eq.s32.totalorder %s12, 1
      %p111 = por %p109, %p110
      %p112 = scmp.ne.s32.totalorder %s104, %s107
      %p113 = scmp.eq.s32.totalorder %s12, 0
      %p114 = por %p112, %p113
      %p115 = scmp.ne.s32.totalorder %s104, %s107
      %p116 = scmp.eq.s32.totalorder %s17, 1
      %p117 = por %p115, %p116
      %p118 = scmp.ne.s32.totalorder %s107, %s108
      %p119 = scmp.eq.s32.totalorder %s17, 0
      %p120 = por %p118, %p119
      %p121 = scmp.ne.s32.totalorder %s107, %s108
      %p122 = scmp.eq.s32.totalorder %s18, 1
      %p123 = por %p121, %p122
      %p125 = scmp.ne.s32.totalorder %s108, %s124
      %p126 = scmp.eq.s32.totalorder %s18, 0
      %p127 = por %p125, %p126
      %p128 = scmp.le.s32.totalorder 1, %s12
      %p129 = scmp.lt.s32.totalorder %s12, 3
      %p130 = pnand %p128, %p129
      %p131 = pneg %p130
      // Predicated region
      $region9: #{tpu_custom_call.1} parent=5 // pred_check
        _
      $region10: #{tpu_custom_call.1} parent=5 // pred_check_branch
        %133 = sbr.rel (%p130) target = $region12
      $region11: #{tpu_custom_call.1} parent=5 // pred_region
        %s134 = ssub.s32 %s12, 1
        // Predicated region
        $region13: #{tpu_custom_call.1} parent=11 // pred_check
          %p135 = pneg %p71
        $region14: #{tpu_custom_call.1} parent=11 // pred_check_branch
          %137 = sbr.rel (%p135) target = $region16
        $region15: #{tpu_custom_call.1} parent=11 // pred_region
          _
        $region16: #{tpu_custom_call.1} parent=11 // pred_fallthru
          _
        // Predicated region
        $region17: #{tpu_custom_call.1} parent=11 // pred_check
          %p138 = pneg %p92
        $region18: #{tpu_custom_call.1} parent=11 // pred_check_branch
          %140 = sbr.rel (%p138) target = $region20
        $region19: #{tpu_custom_call.1} parent=11 // pred_region
          _
        $region20: #{tpu_custom_call.1} parent=11 // pred_fallthru
          _
      $region12: #{tpu_custom_call.1} parent=5 // pred_fallthru
        _
      %p141 = scmp.lt.s32.totalorder %s12, 2
      // Predicated region
      $region21: #{tpu_custom_call.1} parent=5 // pred_check
        %p142 = pneg %p141
      $region22: #{tpu_custom_call.1} parent=5 // pred_check_branch
        %144 = sbr.rel (%p142) target = $region24
      $region23: #{tpu_custom_call.1} parent=5 // pred_region
        // Predicated region
        $region25: #{tpu_custom_call.1} parent=23 // pred_check
          %p145 = pneg %p44
        $region26: #{tpu_custom_call.1} parent=23 // pred_check_branch
          %147 = sbr.rel (%p145) target = $region28
        $region27: #{tpu_custom_call.1} parent=23 // pred_region
          %p148 = scmp.lt.s32.totalorder %s19, 1
          %s149 = scalar_select %p148, %s19, 1
          %s150 = smul.addr %s149, 20
          %s151 = smul.addr %s150, 4
          %s152 = scalar_lea.vmem %s0, %s151
        $region28: #{tpu_custom_call.1} parent=23 // pred_fallthru
          _
      $region24: #{tpu_custom_call.1} parent=5 // pred_fallthru
        _
      %p153 = scmp.le.s32.totalorder 1, %s12
      %p154 = scmp.lt.s32.totalorder %s12, 3
      %p155 = pnand %p153, %p154
      %p156 = pneg %p155
      // Predicated region
      $region29: #{tpu_custom_call.1} parent=5 // pred_check
        _
      $region30: #{tpu_custom_call.1} parent=5 // pred_check_branch
        %158 = sbr.rel (%p155) target = $region32
      $region31: #{tpu_custom_call.1} parent=5 // pred_region
        %s159 = ssub.s32 %s12, 1
        %p160 = scmp.lt.s32.totalorder %s21, 1
        %s161 = scalar_select %p160, %s21, 1
        %s162 = smul.addr %s161, 20
        %s163 = smul.addr %s162, 4
        %s164 = scalar_lea.vmem %s0, %s163
        %p165 = pneg %p50
        %p166 = pneg %p47
        %p167 = pneg %p71
        %p168 = pneg %p68
        %p169 = pneg %p92
        %p170 = pneg %p89
        %p171 = pneg %p120
        %p172 = pneg %p117
        %s173 = sand.u32 %s107, 1
        %s174 = scalar_lea.sflag [#allocation3], %s173
        %s175 = sand.u32 %s107, 1
        %s176 = smul.addr %s175, 8
        %s177 = scalar_lea.vmem [#allocation2], %s176
        %p178 = scmp.lt.s32.totalorder %s21, 1
        %s179 = scalar_select %p178, %s21, 1
        %s180 = smul.addr %s179, 20
        %s181 = smul.addr %s180, 4
        %s182 = scalar_lea.vmem %s0, %s181
        %v184 = vld [vmem:[%s1] sm:$0xff]
        %v185 = vld [vmem:[%s2] sm:$0xff]
        %s186 = smul.u32 %s22, 8
        %s187 = smul.u32 %s186, 2
        %s188 = smul.addr %s187, 4
        %s189 = scalar_lea.vmem %s182, %s188
        %v190 = vld [vmem:[%s189] sm:$0xf]
        %v191 = vld [vmem:[%s189 + $0x4] sm:$0xf]
        %s192 = sadd.s32 %s186, 1
        %s193 = smul.u32 %s192, 2
        %s194 = smul.addr %s193, 4
        %s195 = scalar_lea.vmem %s182, %s194
        %v196 = vld [vmem:[%s195] sm:$0xf]
        %v197 = vld [vmem:[%s195 + $0x4] sm:$0xf]
        %s198 = sadd.s32 %s186, 2
        %s199 = smul.u32 %s198, 2
        %s200 = smul.addr %s199, 4
        %s201 = scalar_lea.vmem %s182, %s200
        %v202 = vld [vmem:[%s201] sm:$0xf]
        %v203 = vld [vmem:[%s201 + $0x4] sm:$0xf]
        %v206 = vunpack.c.l.b16 %v190
        %v207 = vunpack.c.l.b16 %v191
        %v208 = vpack.c.b16 %v207, %v206
        %210 = vrot.lane.b32.xlu0 %v208, 127
        %v211 = vpop.permute.xlu0 %210
        %213 = vrot.lane.b32.xlu0 %v208, 126
        %v214 = vpop.permute.xlu0 %213
        %v218 = vunpack.c.l.b16 %v196
        %v219 = vunpack.c.l.b16 %v197
        %v220 = vpack.c.b16 %v219, %v218
        %222 = vrot.lane.b32.xlu0 %v220, 127
        %v223 = vpop.permute.xlu0 %222
        %225 = vrot.lane.b32.xlu0 %v220, 126
        %v226 = vpop.permute.xlu0 %225
        %v230 = vunpack.c.l.b16 %v202
        %v231 = vunpack.c.l.b16 %v203
        %v232 = vpack.c.b16 %v231, %v230
        %234 = vrot.lane.b32.xlu0 %v232, 127
        %v235 = vpop.permute.xlu0 %234
        %237 = vrot.lane.b32.xlu0 %v232, 126
        %v238 = vpop.permute.xlu0 %237
        %241 = vset.pattern.permute.xlu0 0
        %242 = vperm.xlu0 %241, %v185
        %v243 = vpop.permute.xlu0 %242
        %v246 = vunpack.c.l.b16 %v184
        %v247 = vunpack.c.h.b16 %v184
        %v248 = vpack.c.b16 %v246, %v246
        %v249 = vpack.c.b16 %v247, %v247
        %vm251 = vcmask 130048
        %v253 = vsel %vm251, %v249, 0
        %255 = vmatprep.subr.bf16.mxu0 0
        %256 = vmatpush1.bf16.msra.mxu0 %v208
        %257 = vmatprep.subr.bf16.mxu0 0
        %258 = vmatpush1.bf16.msra.mxu0 %v211
        %259 = vmatprep.subr.bf16.mxu0 0
        %260 = vmatpush1.bf16.msra.mxu0 %v214
        %261 = vmatprep.subr.bf16.mxu0 0
        %262 = vmatpush1.bf16.msra.mxu0 %v220
        %263 = vmatprep.subr.bf16.mxu0 0
        %264 = vmatpush1.bf16.msra.mxu0 %v223
        %265 = vmatprep.subr.bf16.mxu0 0
        %266 = vmatpush1.bf16.msra.mxu0 %v226
        %267 = vmatprep.subr.bf16.mxu0 0
        %268 = vmatpush1.bf16.msra.mxu0 %v232
        %269 = vmatprep.subr.bf16.mxu0 0
        %270 = vmatpush1.bf16.msra.mxu0 %v235
        %271 = vmatprep.subr.bf16.mxu0 0
        %272 = vmatpush1.bf16.msra.mxu0 %v238
        %273 = vmatprep.subr.bf16.mxu0 0
        %274 = vmatpush1.bf16.msra.mxu0 0
        %275 = vmatprep.subr.bf16.mxu0 0
        %276 = vmatpush1.bf16.msra.mxu0 0
        %277 = vmatprep.subr.bf16.mxu0 0
        %278 = vmatpush1.bf16.msra.mxu0 0
        %279 = vmatprep.subr.bf16.mxu0 0
        %280 = vmatpush1.bf16.msra.mxu0 0
        %281 = vmatprep.subr.bf16.mxu0 0
        %282 = vmatpush1.bf16.msra.mxu0 0
        %283 = vmatprep.subr.bf16.mxu0 0
        %284 = vmatpush1.bf16.msra.mxu0 0
        %285 = vmatprep.subr.bf16.mxu0 0
        %286 = vmatpush1.bf16.msra.mxu0 0
        %287 = vmatprep.mubr.bf16.mxu0 %v253
        %288 = vmatmul.mubr.bf16.gmra.mrb[0].mxu0 %v248
        %v289 = vpop.f32.mrb[0].mxu0
        %v290 = vadd.f32 %v243, %v289
        %v291 = vpop.f32.mrb[0].mxu0
        %v292 = vpop.f32.mrb[0].mxu0
        %v293 = vpop.f32.mrb[0].mxu0
        %294 = vdwg.mxu0
        %v295 = vmax.f32 %v290, 0.0
        %s296 = sadd.s32 %s186, 3
        %s297 = smul.u32 %s296, 2
        %s298 = smul.addr %s297, 4
        %s299 = scalar_lea.vmem %s182, %s298
        %v300 = vld [vmem:[%s299] sm:$0xf]
        %v301 = vld [vmem:[%s299 + $0x4] sm:$0xf]
        %v304 = vunpack.c.l.b16 %v300
        %v305 = vunpack.c.l.b16 %v301
        %v306 = vpack.c.b16 %v305, %v304
        %308 = vrot.lane.b32.xlu0 %v306, 127
        %v309 = vpop.permute.xlu0 %308
        %311 = vrot.lane.b32.xlu0 %v306, 126
        %v312 = vpop.permute.xlu0 %311
        %314 = vmatprep.subr.bf16.mxu0 0
        %315 = vmatpush1.bf16.msra.mxu0 %v220
        %316 = vmatprep.subr.bf16.mxu0 0
        %317 = vmatpush1.bf16.msra.mxu0 %v223
        %318 = vmatprep.subr.bf16.mxu0 0
        %319 = vmatpush1.bf16.msra.mxu0 %v226
        %320 = vmatprep.subr.bf16.mxu0 0
        %321 = vmatpush1.bf16.msra.mxu0 %v232
        %322 = vmatprep.subr.bf16.mxu0 0
        %323 = vmatpush1.bf16.msra.mxu0 %v235
        %324 = vmatprep.subr.bf16.mxu0 0
        %325 = vmatpush1.bf16.msra.mxu0 %v238
        %326 = vmatprep.subr.bf16.mxu0 0
        %327 = vmatpush1.bf16.msra.mxu0 %v306
        %328 = vmatprep.subr.bf16.mxu0 0
        %329 = vmatpush1.bf16.msra.mxu0 %v309
        %330 = vmatprep.subr.bf16.mxu0 0
        %331 = vmatpush1.bf16.msra.mxu0 %v312
        %332 = vmatprep.subr.bf16.mxu0 0
        %333 = vmatpush1.bf16.msra.mxu0 0
        %334 = vmatprep.subr.bf16.mxu0 0
        %335 = vmatpush1.bf16.msra.mxu0 0
        %336 = vmatprep.subr.bf16.mxu0 0
        %337 = vmatpush1.bf16.msra.mxu0 0
        %338 = vmatprep.subr.bf16.mxu0 0
        %339 = vmatpush1.bf16.msra.mxu0 0
        %340 = vmatprep.subr.bf16.mxu0 0
        %341 = vmatpush1.bf16.msra.mxu0 0
        %342 = vmatprep.subr.bf16.mxu0 0
        %343 = vmatpush1.bf16.msra.mxu0 0
        %344 = vmatprep.subr.bf16.mxu0 0
        %345 = vmatpush1.bf16.msra.mxu0 0
        %346 = vmatprep.mubr.bf16.mxu0 %v253
        %347 = vmatmul.mubr.bf16.gmra.mrb[0].mxu0 %v248
        %v348 = vpop.f32.mrb[0].mxu0
        %v349 = vadd.f32 %v243, %v348
        %v350 = vpop.f32.mrb[0].mxu0
        %v351 = vpop.f32.mrb[0].mxu0
        %v352 = vpop.f32.mrb[0].mxu0
        %353 = vdwg.mxu0
        %v354 = vmax.f32 %v349, 0.0
        %s355 = sadd.s32 %s186, 4
        %s356 = smul.u32 %s355, 2
        %s357 = smul.addr %s356, 4
        %s358 = scalar_lea.vmem %s182, %s357
        %v359 = vld [vmem:[%s358] sm:$0xf]
        %v360 = vld [vmem:[%s358 + $0x4] sm:$0xf]
        %v363 = vunpack.c.l.b16 %v359
        %v364 = vunpack.c.l.b16 %v360
        %v365 = vpack.c.b16 %v364, %v363
        %367 = vrot.lane.b32.xlu0 %v365, 127
        %v368 = vpop.permute.xlu0 %367
        %370 = vrot.lane.b32.xlu0 %v365, 126
        %v371 = vpop.permute.xlu0 %370
        %373 = vmatprep.subr.bf16.mxu0 0
        %374 = vmatpush1.bf16.msra.mxu0 %v232
        %375 = vmatprep.subr.bf16.mxu0 0
        %376 = vmatpush1.bf16.msra.mxu0 %v235
        %377 = vmatprep.subr.bf16.mxu0 0
        %378 = vmatpush1.bf16.msra.mxu0 %v238
        %379 = vmatprep.subr.bf16.mxu0 0
        %380 = vmatpush1.bf16.msra.mxu0 %v306
        %381 = vmatprep.subr.bf16.mxu0 0
        %382 = vmatpush1.bf16.msra.mxu0 %v309
        %383 = vmatprep.subr.bf16.mxu0 0
        %384 = vmatpush1.bf16.msra.mxu0 %v312
        %385 = vmatprep.subr.bf16.mxu0 0
        %386 = vmatpush1.bf16.msra.mxu0 %v365
        %387 = vmatprep.subr.bf16.mxu0 0
        %388 = vmatpush1.bf16.msra.mxu0 %v368
        %389 = vmatprep.subr.bf16.mxu0 0
        %390 = vmatpush1.bf16.msra.mxu0 %v371
        %391 = vmatprep.subr.bf16.mxu0 0
        %392 = vmatpush1.bf16.msra.mxu0 0
        %393 = vmatprep.subr.bf16.mxu0 0
        %394 = vmatpush1.bf16.msra.mxu0 0
        %395 = vmatprep.subr.bf16.mxu0 0
        %396 = vmatpush1.bf16.msra.mxu0 0
        %397 = vmatprep.subr.bf16.mxu0 0
        %398 = vmatpush1.bf16.msra.mxu0 0
        %399 = vmatprep.subr.bf16.mxu0 0
        %400 = vmatpush1.bf16.msra.mxu0 0
        %401 = vmatprep.subr.bf16.mxu0 0
        %402 = vmatpush1.bf16.msra.mxu0 0
        %403 = vmatprep.subr.bf16.mxu0 0
        %404 = vmatpush1.bf16.msra.mxu0 0
        %405 = vmatprep.mubr.bf16.mxu0 %v253
        %406 = vmatmul.mubr.bf16.gmra.mrb[0].mxu0 %v248
        %v407 = vpop.f32.mrb[0].mxu0
        %v408 = vadd.f32 %v243, %v407
        %v409 = vpop.f32.mrb[0].mxu0
        %v410 = vpop.f32.mrb[0].mxu0
        %v411 = vpop.f32.mrb[0].mxu0
        %412 = vdwg.mxu0
        %v413 = vmax.f32 %v408, 0.0
        %s414 = sadd.s32 %s186, 5
        %s415 = smul.u32 %s414, 2
        %s416 = smul.addr %s415, 4
        %s417 = scalar_lea.vmem %s182, %s416
        %v418 = vld [vmem:[%s417] sm:$0xf]
        %v419 = vld [vmem:[%s417 + $0x4] sm:$0xf]
        %v422 = vunpack.c.l.b16 %v418
        %v423 = vunpack.c.l.b16 %v419
        %v424 = vpack.c.b16 %v423, %v422
        %426 = vrot.lane.b32.xlu0 %v424, 127
        %v427 = vpop.permute.xlu0 %426
        %429 = vrot.lane.b32.xlu0 %v424, 126
        %v430 = vpop.permute.xlu0 %429
        %432 = vmatprep.subr.bf16.mxu0 0
        %433 = vmatpush1.bf16.msra.mxu0 %v306
        %434 = vmatprep.subr.bf16.mxu0 0
        %435 = vmatpush1.bf16.msra.mxu0 %v309
        %436 = vmatprep.subr.bf16.mxu0 0
        %437 = vmatpush1.bf16.msra.mxu0 %v312
        %438 = vmatprep.subr.bf16.mxu0 0
        %439 = vmatpush1.bf16.msra.mxu0 %v365
        %440 = vmatprep.subr.bf16.mxu0 0
        %441 = vmatpush1.bf16.msra.mxu0 %v368
        %442 = vmatprep.subr.bf16.mxu0 0
        %443 = vmatpush1.bf16.msra.mxu0 %v371
        %444 = vmatprep.subr.bf16.mxu0 0
        %445 = vmatpush1.bf16.msra.mxu0 %v424
        %446 = vmatprep.subr.bf16.mxu0 0
        %447 = vmatpush1.bf16.msra.mxu0 %v427
        %448 = vmatprep.subr.bf16.mxu0 0
        %449 = vmatpush1.bf16.msra.mxu0 %v430
        %450 = vmatprep.subr.bf16.mxu0 0
        %451 = vmatpush1.bf16.msra.mxu0 0
        %452 = vmatprep.subr.bf16.mxu0 0
        %453 = vmatpush1.bf16.msra.mxu0 0
        %454 = vmatprep.subr.bf16.mxu0 0
        %455 = vmatpush1.bf16.msra.mxu0 0
        %456 = vmatprep.subr.bf16.mxu0 0
        %457 = vmatpush1.bf16.msra.mxu0 0
        %458 = vmatprep.subr.bf16.mxu0 0
        %459 = vmatpush1.bf16.msra.mxu0 0
        %460 = vmatprep.subr.bf16.mxu0 0
        %461 = vmatpush1.bf16.msra.mxu0 0
        %462 = vmatprep.subr.bf16.mxu0 0
        %463 = vmatpush1.bf16.msra.mxu0 0
        %464 = vmatprep.mubr.bf16.mxu0 %v253
        %465 = vmatmul.mubr.bf16.gmra.mrb[0].mxu0 %v248
        %v466 = vpop.f32.mrb[0].mxu0
        %v467 = vadd.f32 %v243, %v466
        %v468 = vpop.f32.mrb[0].mxu0
        %v469 = vpop.f32.mrb[0].mxu0
        %v470 = vpop.f32.mrb[0].mxu0
        %471 = vdwg.mxu0
        %v472 = vmax.f32 %v467, 0.0
        %s473 = sadd.s32 %s186, 6
        %s474 = smul.u32 %s473, 2
        %s475 = smul.addr %s474, 4
        %s476 = scalar_lea.vmem %s182, %s475
        %v477 = vld [vmem:[%s476] sm:$0xf]
        %v478 = vld [vmem:[%s476 + $0x4] sm:$0xf]
        %v481 = vunpack.c.l.b16 %v477
        %v482 = vunpack.c.l.b16 %v478
        %v483 = vpack.c.b16 %v482, %v481
        %485 = vrot.lane.b32.xlu0 %v483, 127
        %v486 = vpop.permute.xlu0 %485
        %488 = vrot.lane.b32.xlu0 %v483, 126
        %v489 = vpop.permute.xlu0 %488
        %491 = vmatprep.subr.bf16.mxu0 0
        %492 = vmatpush1.bf16.msra.mxu0 %v365
        %493 = vmatprep.subr.bf16.mxu0 0
        %494 = vmatpush1.bf16.msra.mxu0 %v368
        %495 = vmatprep.subr.bf16.mxu0 0
        %496 = vmatpush1.bf16.msra.mxu0 %v371
        %497 = vmatprep.subr.bf16.mxu0 0
        %498 = vmatpush1.bf16.msra.mxu0 %v424
        %499 = vmatprep.subr.bf16.mxu0 0
        %500 = vmatpush1.bf16.msra.mxu0 %v427
        %501 = vmatprep.subr.bf16.mxu0 0
        %502 = vmatpush1.bf16.msra.mxu0 %v430
        %503 = vmatprep.subr.bf16.mxu0 0
        %504 = vmatpush1.bf16.msra.mxu0 %v483
        %505 = vmatprep.subr.bf16.mxu0 0
        %506 = vmatpush1.bf16.msra.mxu0 %v486
        %507 = vmatprep.subr.bf16.mxu0 0
        %508 = vmatpush1.bf16.msra.mxu0 %v489
        %509 = vmatprep.subr.bf16.mxu0 0
        %510 = vmatpush1.bf16.msra.mxu0 0
        %511 = vmatprep.subr.bf16.mxu0 0
        %512 = vmatpush1.bf16.msra.mxu0 0
        %513 = vmatprep.subr.bf16.mxu0 0
        %514 = vmatpush1.bf16.msra.mxu0 0
        %515 = vmatprep.subr.bf16.mxu0 0
        %516 = vmatpush1.bf16.msra.mxu0 0
        %517 = vmatprep.subr.bf16.mxu0 0
        %518 = vmatpush1.bf16.msra.mxu0 0
        %519 = vmatprep.subr.bf16.mxu0 0
        %520 = vmatpush1.bf16.msra.mxu0 0
        %521 = vmatprep.subr.bf16.mxu0 0
        %522 = vmatpush1.bf16.msra.mxu0 0
        %523 = vmatprep.mubr.bf16.mxu0 %v253
        %524 = vmatmul.mubr.bf16.gmra.mrb[0].mxu0 %v248
        %v525 = vpop.f32.mrb[0].mxu0
        %v526 = vadd.f32 %v243, %v525
        %v527 = vpop.f32.mrb[0].mxu0
        %v528 = vpop.f32.mrb[0].mxu0
        %v529 = vpop.f32.mrb[0].mxu0
        %530 = vdwg.mxu0
        %v531 = vmax.f32 %v526, 0.0
        %s532 = sadd.s32 %s186, 7
        %s533 = smul.u32 %s532, 2
        %s534 = smul.addr %s533, 4
        %s535 = scalar_lea.vmem %s182, %s534
        %v536 = vld [vmem:[%s535] sm:$0xf]
        %v537 = vld [vmem:[%s535 + $0x4] sm:$0xf]
        %v540 = vunpack.c.l.b16 %v536
        %v541 = vunpack.c.l.b16 %v537
        %v542 = vpack.c.b16 %v541, %v540
        %544 = vrot.lane.b32.xlu0 %v542, 127
        %v545 = vpop.permute.xlu0 %544
        %547 = vrot.lane.b32.xlu0 %v542, 126
        %v548 = vpop.permute.xlu0 %547
        %550 = vmatprep.subr.bf16.mxu0 0
        %551 = vmatpush1.bf16.msra.mxu0 %v424
        %552 = vmatprep.subr.bf16.mxu0 0
        %553 = vmatpush1.bf16.msra.mxu0 %v427
        %554 = vmatprep.subr.bf16.mxu0 0
        %555 = vmatpush1.bf16.msra.mxu0 %v430
        %556 = vmatprep.subr.bf16.mxu0 0
        %557 = vmatpush1.bf16.msra.mxu0 %v483
        %558 = vmatprep.subr.bf16.mxu0 0
        %559 = vmatpush1.bf16.msra.mxu0 %v486
        %560 = vmatprep.subr.bf16.mxu0 0
        %561 = vmatpush1.bf16.msra.mxu0 %v489
        %562 = vmatprep.subr.bf16.mxu0 0
        %563 = vmatpush1.bf16.msra.mxu0 %v542
        %564 = vmatprep.subr.bf16.mxu0 0
        %565 = vmatpush1.bf16.msra.mxu0 %v545
        %566 = vmatprep.subr.bf16.mxu0 0
        %567 = vmatpush1.bf16.msra.mxu0 %v548
        %568 = vmatprep.subr.bf16.mxu0 0
        %569 = vmatpush1.bf16.msra.mxu0 0
        %570 = vmatprep.subr.bf16.mxu0 0
        %571 = vmatpush1.bf16.msra.mxu0 0
        %572 = vmatprep.subr.bf16.mxu0 0
        %573 = vmatpush1.bf16.msra.mxu0 0
        %574 = vmatprep.subr.bf16.mxu0 0
        %575 = vmatpush1.bf16.msra.mxu0 0
        %576 = vmatprep.subr.bf16.mxu0 0
        %577 = vmatpush1.bf16.msra.mxu0 0
        %578 = vmatprep.subr.bf16.mxu0 0
        %579 = vmatpush1.bf16.msra.mxu0 0
        %580 = vmatprep.subr.bf16.mxu0 0
        %581 = vmatpush1.bf16.msra.mxu0 0
        %582 = vmatprep.mubr.bf16.mxu0 %v253
        %583 = vmatmul.mubr.bf16.gmra.mrb[0].mxu0 %v248
        %v584 = vpop.f32.mrb[0].mxu0
        %v585 = vadd.f32 %v243, %v584
        %v586 = vpop.f32.mrb[0].mxu0
        %v587 = vpop.f32.mrb[0].mxu0
        %v588 = vpop.f32.mrb[0].mxu0
        %589 = vdwg.mxu0
        %v590 = vmax.f32 %v585, 0.0
        %s591 = sadd.s32 %s186, 8
        %s592 = smul.u32 %s591, 2
        %s593 = smul.addr %s592, 4
        %s594 = scalar_lea.vmem %s182, %s593
        %v595 = vld [vmem:[%s594] sm:$0xf]
        %v596 = vld [vmem:[%s594 + $0x4] sm:$0xf]
        %v599 = vunpack.c.l.b16 %v595
        %v600 = vunpack.c.l.b16 %v596
        %v601 = vpack.c.b16 %v600, %v599
        %603 = vrot.lane.b32.xlu0 %v601, 127
        %v604 = vpop.permute.xlu0 %603
        %606 = vrot.lane.b32.xlu0 %v601, 126
        %v607 = vpop.permute.xlu0 %606
        %609 = vmatprep.subr.bf16.mxu0 0
        %610 = vmatpush1.bf16.msra.mxu0 %v483
        %611 = vmatprep.subr.bf16.mxu0 0
        %612 = vmatpush1.bf16.msra.mxu0 %v486
        %613 = vmatprep.subr.bf16.mxu0 0
        %614 = vmatpush1.bf16.msra.mxu0 %v489
        %615 = vmatprep.subr.bf16.mxu0 0
        %616 = vmatpush1.bf16.msra.mxu0 %v542
        %617 = vmatprep.subr.bf16.mxu0 0
        %618 = vmatpush1.bf16.msra.mxu0 %v545
        %619 = vmatprep.subr.bf16.mxu0 0
        %620 = vmatpush1.bf16.msra.mxu0 %v548
        %621 = vmatprep.subr.bf16.mxu0 0
        %622 = vmatpush1.bf16.msra.mxu0 %v601
        %623 = vmatprep.subr.bf16.mxu0 0
        %624 = vmatpush1.bf16.msra.mxu0 %v604
        %625 = vmatprep.subr.bf16.mxu0 0
        %626 = vmatpush1.bf16.msra.mxu0 %v607
        %627 = vmatprep.subr.bf16.mxu0 0
        %628 = vmatpush1.bf16.msra.mxu0 0
        %629 = vmatprep.subr.bf16.mxu0 0
        %630 = vmatpush1.bf16.msra.mxu0 0
        %631 = vmatprep.subr.bf16.mxu0 0
        %632 = vmatpush1.bf16.msra.mxu0 0
        %633 = vmatprep.subr.bf16.mxu0 0
        %634 = vmatpush1.bf16.msra.mxu0 0
        %635 = vmatprep.subr.bf16.mxu0 0
        %636 = vmatpush1.bf16.msra.mxu0 0
        %637 = vmatprep.subr.bf16.mxu0 0
        %638 = vmatpush1.bf16.msra.mxu0 0
        %639 = vmatprep.subr.bf16.mxu0 0
        %640 = vmatpush1.bf16.msra.mxu0 0
        %641 = vmatprep.mubr.bf16.mxu0 %v253
        %642 = vmatmul.mubr.bf16.gmra.mrb[0].mxu0 %v248
        %v643 = vpop.f32.mrb[0].mxu0
        %v644 = vadd.f32 %v243, %v643
        %v645 = vpop.f32.mrb[0].mxu0
        %v646 = vpop.f32.mrb[0].mxu0
        %v647 = vpop.f32.mrb[0].mxu0
        %648 = vdwg.mxu0
        %v649 = vmax.f32 %v644, 0.0
        %s650 = sadd.s32 %s186, 9
        %s651 = smul.u32 %s650, 2
        %s652 = smul.addr %s651, 4
        %s653 = scalar_lea.vmem %s182, %s652
        %v654 = vld [vmem:[%s653] sm:$0xf]
        %v655 = vld [vmem:[%s653 + $0x4] sm:$0xf]
        %v658 = vunpack.c.l.b16 %v654
        %v659 = vunpack.c.l.b16 %v655
        %v660 = vpack.c.b16 %v659, %v658
        %662 = vrot.lane.b32.xlu0 %v660, 127
        %v663 = vpop.permute.xlu0 %662
        %665 = vrot.lane.b32.xlu0 %v660, 126
        %v666 = vpop.permute.xlu0 %665
        %668 = vmatprep.subr.bf16.mxu0 0
        %669 = vmatpush1.bf16.msra.mxu0 %v542
        %670 = vmatprep.subr.bf16.mxu0 0
        %671 = vmatpush1.bf16.msra.mxu0 %v545
        %672 = vmatprep.subr.bf16.mxu0 0
        %673 = vmatpush1.bf16.msra.mxu0 %v548
        %674 = vmatprep.subr.bf16.mxu0 0
        %675 = vmatpush1.bf16.msra.mxu0 %v601
        %676 = vmatprep.subr.bf16.mxu0 0
        %677 = vmatpush1.bf16.msra.mxu0 %v604
        %678 = vmatprep.subr.bf16.mxu0 0
        %679 = vmatpush1.bf16.msra.mxu0 %v607
        %680 = vmatprep.subr.bf16.mxu0 0
        %681 = vmatpush1.bf16.msra.mxu0 %v660
        %682 = vmatprep.subr.bf16.mxu0 0
        %683 = vmatpush1.bf16.msra.mxu0 %v663
        %684 = vmatprep.subr.bf16.mxu0 0
        %685 = vmatpush1.bf16.msra.mxu0 %v666
        %686 = vmatprep.subr.bf16.mxu0 0
        %687 = vmatpush1.bf16.msra.mxu0 0
        %688 = vmatprep.subr.bf16.mxu0 0
        %689 = vmatpush1.bf16.msra.mxu0 0
        %690 = vmatprep.subr.bf16.mxu0 0
        %691 = vmatpush1.bf16.msra.mxu0 0
        %692 = vmatprep.subr.bf16.mxu0 0
        %693 = vmatpush1.bf16.msra.mxu0 0
        %694 = vmatprep.subr.bf16.mxu0 0
        %695 = vmatpush1.bf16.msra.mxu0 0
        %696 = vmatprep.subr.bf16.mxu0 0
        %697 = vmatpush1.bf16.msra.mxu0 0
        %698 = vmatprep.subr.bf16.mxu0 0
        %699 = vmatpush1.bf16.msra.mxu0 0
        %700 = vmatprep.mubr.bf16.mxu0 %v253
        %701 = vmatmul.mubr.bf16.gmra.mrb[0].mxu0 %v248
        %v702 = vpop.f32.mrb[0].mxu0
        %v703 = vadd.f32 %v243, %v702
        %v704 = vpop.f32.mrb[0].mxu0
        %v705 = vpop.f32.mrb[0].mxu0
        %v706 = vpop.f32.mrb[0].mxu0
        %707 = vdwg.mxu0
        %v708 = vmax.f32 %v703, 0.0
        %710 = vrot.lane.b32.xlu0 %v354, 8
        %v711 = vpop.permute.xlu0 %710
        %714 = vrot.lane.b32.xlu0 %v413, 16
        %v715 = vpop.permute.xlu0 %714
        %718 = vrot.lane.b32.xlu0 %v472, 24
        %v719 = vpop.permute.xlu0 %718
        %722 = vrot.lane.b32.xlu0 %v531, 32
        %v723 = vpop.permute.xlu0 %722
        %726 = vrot.lane.b32.xlu0 %v590, 40
        %v727 = vpop.permute.xlu0 %726
        %730 = vrot.lane.b32.xlu0 %v649, 48
        %v731 = vpop.permute.xlu0 %730
        %734 = vrot.lane.b32.xlu0 %v708, 56
        %v735 = vpop.permute.xlu0 %734
        %vm737 = vcmask 64512
        %v738 = vsel %vm737, %v295, %v711
        %v739 = vsel %vm251, %v738, %v715
        %vm740 = vcmask 195584
        %v741 = vsel %vm740, %v739, %v719
        %vm742 = vcmask 261120
        %v743 = vsel %vm742, %v741, %v723
        %vm744 = vcmask 326656
        %v745 = vsel %vm744, %v743, %v727
        %vm746 = vcmask 392192
        %v747 = vsel %vm746, %v745, %v731
        %vm748 = vcmask 457728
        %v749 = vsel %vm748, %v747, %v735
        %vm750 = vcmask 523264
        %751 = vst.msk [vmem:[%s177] sm:$0xff] %vm750, %v749
        %s752 = sand.u32 %s107, 1
        %s753 = scalar_lea.sflag [#allocation3], %s752
        %s754 = sand.u32 %s107, 1
        %s755 = smul.addr %s754, 8
        %s756 = scalar_lea.vmem [#allocation2], %s755
        // Predicated region
        $region33: #{tpu_custom_call.1} parent=31 // pred_check
          %p757 = pneg %p117
        $region34: #{tpu_custom_call.1} parent=31 // pred_check_branch
          %759 = sbr.rel (%p757) target = $region36
        $region35: #{tpu_custom_call.1} parent=31 // pred_region
          %s761 = ssub.s32 128, 128
          %762 = vsyncadd %s753, %s761
          %s763 = sadd.s32 %s22, %s21
          %s764 = smul.addr %s763, 128
          %s765 = scalar_lea.hbm %s3, %s764
          %s767 = sshll.u32 %s756, 4
          %s768 = int_to_ptr.vmem [resolvable:$true] %s767
          %770 = dma.vmem_to_hbm [thread:$0]  %s768, 128, %s765, %s753
        $region36: #{tpu_custom_call.1} parent=31 // pred_fallthru
          _
      $region32: #{tpu_custom_call.1} parent=5 // pred_fallthru
        _
      %p771 = scmp.le.s32.totalorder 2, %s12
      // Predicated region
      $region37: #{tpu_custom_call.1} parent=5 // pred_check
        %p772 = pneg %p771
      $region38: #{tpu_custom_call.1} parent=5 // pred_check_branch
        %774 = sbr.rel (%p772) target = $region40
      $region39: #{tpu_custom_call.1} parent=5 // pred_region
        %s775 = ssub.s32 %s12, 2
        // Predicated region
        $region41: #{tpu_custom_call.1} parent=39 // pred_check
          %p776 = pneg %p123
        $region42: #{tpu_custom_call.1} parent=39 // pred_check_branch
          %778 = sbr.rel (%p776) target = $region44
        $region43: #{tpu_custom_call.1} parent=39 // pred_region
          %s779 = sand.u32 %s108, 1
          %s780 = scalar_lea.sflag [#allocation3], %s779
          %s781 = sand.u32 %s108, 1
          %s782 = smul.addr %s781, 8
          %s783 = scalar_lea.vmem [#allocation2], %s782
          %784 = dma.done %s780, 128
        $region44: #{tpu_custom_call.1} parent=39 // pred_fallthru
          _
      $region40: #{tpu_custom_call.1} parent=5 // pred_fallthru
        _
    $region6: #{tpu_custom_call.1} parent=1 // loop_footer
      %s16 = sadd.s32 1, %s12
    $region7: #{tpu_custom_call.1} parent=1 // loop_footer_branch
      %11 = sbr.rel target = $region3
    $region8: #{tpu_custom_call.1} parent=1 // loop_exit
      _
    %785 = vsyncpa [#allocation3], 1
    %s786 = scalar_lea.sflag [#allocation3], 1
    %787 = vsyncpa %s786, 1

</llo_original>
